<compile_context>
chip_gen: v6e
topology: v6e:2x2x1
jax: 0.10.0
libtpu: 0.0.40
codegen_flags: <defaults>
</compile_context>

<pallas_src>
import jax
import jax.numpy as jnp
from jax.experimental import pallas as pl
from jax.experimental.pallas import tpu as pltpu

IN_FEATURES = 3
OUT_FEATURES = 8
GATE_C = 0.044715 * 0.7978845608028654   # folded scalar constant

MIN_PALLAS_B = 1024        # below this, plain XLA beats kernel dispatch overhead
TB_MAX = 16384             # max batch lanes per grid step (<< VMEM on all chips)


def _round_up(n, m):
    return ((n + m - 1) // m) * m


def _gate(v1):
    # v8 = (0.5*v1) * (1 + tanh(GATE_C * v1)) == v1 * (0.5*tanh(GATE_C*v1) + 0.5)
    return v1 * (0.5 * jnp.tanh(v1 * GATE_C) + 0.5)


def reference(x, w, b):
    return _gate(x @ w + b)


def _fused_linear_gate_kernel(p_ref, x_ref, o_ref):
    p = p_ref[...]                      # (8, 4) : [W^T | b], resident across steps
    x = x_ref[...]                      # (3, tb): features on sublanes, batch on lanes
    # K=3 contraction as dense broadcast FMAs on the VPU (MXU is wasteful for K=3).
    v1 = (p[:, 0:1] * x[0:1, :]
          + p[:, 1:2] * x[1:2, :]
          + p[:, 2:3] * x[2:3, :]
          + p[:, 3:4])                  # (8, tb)
    o_ref[...] = v1 * (0.5 * jnp.tanh(v1 * GATE_C) + 0.5)


def fused_linear_gate(x, w, b):
    """x: (B, IN), w: (IN, OUT), b: (OUT,) -> (B, OUT)."""
    B = x.shape[0]
    if B < MIN_PALLAS_B:
        # Tiny batches (incl. the module's (1, 3) input): fused XLA expression.
        return reference(x, w, b)

    # Pack params into one tiny tile: rows = output features, cols = [w0 w1 w2 b].
    params = jnp.concatenate([w.T, b.reshape(OUT_FEATURES, 1)], axis=1)  # (8, 4)
    x_t = x.T                                                            # (3, B)

    # Tile size: multiple of 128 lanes, at least 2 grid steps (v7x megacore),
    # capped so double-buffered x/out blocks stay ~1.4 MiB of VMEM.
    tb = min(TB_MAX, _round_up(pl.cdiv(B, 2), 128))
    grid = (pl.cdiv(B, tb),)

    out_t = pl.pallas_call(
        _fused_linear_gate_kernel,
        out_shape=jax.ShapeDtypeStruct((OUT_FEATURES, B), jnp.float32),
        grid_spec=pltpu.PrefetchScalarGridSpec(
            num_scalar_prefetch=0,
            grid=grid,
            in_specs=[
                # params: constant index_map -> stays resident in VMEM.
                pl.BlockSpec((OUT_FEATURES, IN_FEATURES + 1), lambda i: (0, 0)),
                # x^T streams through VMEM block-by-block (double-buffered).
                pl.BlockSpec((IN_FEATURES, tb), lambda i: (0, i)),
            ],
            out_specs=pl.BlockSpec((OUT_FEATURES, tb), lambda i: (0, i)),
        ),
        compiler_params=pltpu.CompilerParams(
            dimension_semantics=("parallel",),   # batch tiles are independent
        ),
    )(params, x_t)

    return out_t.T


def init_params(key):
    # Deterministic init mimicking torch.nn.Linear(3, 8):
    # U(-1/sqrt(fan_in), 1/sqrt(fan_in)) for both weight and bias.
    kw, kb = jax.random.split(key)
    bound = 1.0 / jnp.sqrt(jnp.float32(IN_FEATURES))
    w = jax.random.uniform(kw, (IN_FEATURES, OUT_FEATURES),
                           minval=-bound, maxval=bound, dtype=jnp.float32)
    b = jax.random.uniform(kb, (OUT_FEATURES,),
                           minval=-bound, maxval=bound, dtype=jnp.float32)
    return w, b


if __name__ == "__main__":
    key = jax.random.PRNGKey(0)
    kx, kp, kx2, kx3 = jax.random.split(key, 4)
    w, b = init_params(kp)

    # Module-faithful input (1, 3): goes through the small-batch XLA fast path.
    x_small = jax.random.normal(kx, (1, IN_FEATURES), dtype=jnp.float32)
    out_small = jax.block_until_ready(fused_linear_gate(x_small, w, b))
    assert out_small.shape == (1, OUT_FEATURES)
    assert jnp.allclose(out_small, reference(x_small, w, b), atol=1e-5, rtol=1e-5)

    # Batched inputs exercising the Pallas kernel:
    #  - 4096 + 37 rows: 2 grid steps with a partial (clipped) tail block.
    #  - 8192 rows:      2 exact grid steps.
    for k, n in ((kx2, 4096 + 37), (kx3, 8192)):
        xb = jax.random.normal(k, (n, IN_FEATURES), dtype=jnp.float32)
        outb = jax.block_until_ready(fused_linear_gate(xb, w, b))
        refb = reference(xb, w, b)
        assert outb.shape == (n, OUT_FEATURES)
        assert jnp.allclose(outb, refb, atol=1e-5, rtol=1e-5)

    print("KERNEL_OK")
</pallas_src>

<mosaic_0001>
module attributes {stable_mosaic.version = 11 : i64} {
  func.func @_fused_linear_gate_kernel(%arg0: i32, %arg1: memref<8x4xf32, #tpu.memory_space<vmem>>, %arg2: memref<3x2176xf32, #tpu.memory_space<vmem>>, %arg3: memref<8x2176xf32, #tpu.memory_space<vmem>>) attributes {dimension_semantics = [#tpu.dimension_semantics<parallel>], iteration_bounds = array<i64: 2>, scalar_prefetch = 0 : i64, scratch_operands = 0 : i64, tpu.core_type = #tpu.core_type<tc>, window_params = [{pipeline_mode = #tpu.pipeline_mode<synchronous>, transform_indices = @transform_0, window_bounds = array<i64: 8, 4>}, {transform_indices = @transform_1, window_bounds = array<i64: 3, 2176>}, {transform_indices = @transform_2, window_bounds = array<i64: 8, 2176>}]} {
    %c0 = arith.constant 0 : index
    %c0_0 = arith.constant 0 : index
    %0 = vector.load %arg1[%c0, %c0_0] : memref<8x4xf32, #tpu.memory_space<vmem>>, vector<8x4xf32>
    %c0_1 = arith.constant 0 : index
    %c0_2 = arith.constant 0 : index
    %1 = vector.load %arg2[%c0_1, %c0_2] : memref<3x2176xf32, #tpu.memory_space<vmem>>, vector<3x2176xf32>
    %2 = vector.extract_strided_slice %0 {offsets = [0, 0], sizes = [8, 1], strides = [1, 1]} : vector<8x4xf32> to vector<8x1xf32>
    %3 = vector.extract_strided_slice %1 {offsets = [0, 0], sizes = [1, 2176], strides = [1, 1]} : vector<3x2176xf32> to vector<1x2176xf32>
    %4 = vector.broadcast %2 : vector<8x1xf32> to vector<8x2176xf32>
    %5 = vector.broadcast %3 : vector<1x2176xf32> to vector<8x2176xf32>
    %6 = arith.mulf %4, %5 : vector<8x2176xf32>
    %7 = vector.extract_strided_slice %0 {offsets = [0, 1], sizes = [8, 1], strides = [1, 1]} : vector<8x4xf32> to vector<8x1xf32>
    %8 = vector.extract_strided_slice %1 {offsets = [1, 0], sizes = [1, 2176], strides = [1, 1]} : vector<3x2176xf32> to vector<1x2176xf32>
    %9 = vector.broadcast %7 : vector<8x1xf32> to vector<8x2176xf32>
    %10 = vector.broadcast %8 : vector<1x2176xf32> to vector<8x2176xf32>
    %11 = arith.mulf %9, %10 : vector<8x2176xf32>
    %12 = arith.addf %6, %11 : vector<8x2176xf32>
    %13 = vector.extract_strided_slice %0 {offsets = [0, 2], sizes = [8, 1], strides = [1, 1]} : vector<8x4xf32> to vector<8x1xf32>
    %14 = vector.extract_strided_slice %1 {offsets = [2, 0], sizes = [1, 2176], strides = [1, 1]} : vector<3x2176xf32> to vector<1x2176xf32>
    %15 = vector.broadcast %13 : vector<8x1xf32> to vector<8x2176xf32>
    %16 = vector.broadcast %14 : vector<1x2176xf32> to vector<8x2176xf32>
    %17 = arith.mulf %15, %16 : vector<8x2176xf32>
    %18 = arith.addf %12, %17 : vector<8x2176xf32>
    %19 = vector.extract_strided_slice %0 {offsets = [0, 3], sizes = [8, 1], strides = [1, 1]} : vector<8x4xf32> to vector<8x1xf32>
    %20 = vector.broadcast %19 : vector<8x1xf32> to vector<8x2176xf32>
    %21 = arith.addf %18, %20 : vector<8x2176xf32>
    %cst = arith.constant 0.0356774069 : f32
    %22 = vector.broadcast %cst : f32 to vector<8x2176xf32>
    %23 = arith.mulf %21, %22 : vector<8x2176xf32>
    %24 = math.tanh %23 : vector<8x2176xf32>
    %cst_3 = arith.constant 5.000000e-01 : f32
    %25 = vector.broadcast %cst_3 : f32 to vector<8x2176xf32>
    %26 = arith.mulf %25, %24 : vector<8x2176xf32>
    %cst_4 = arith.constant 5.000000e-01 : f32
    %27 = vector.broadcast %cst_4 : f32 to vector<8x2176xf32>
    %28 = arith.addf %26, %27 : vector<8x2176xf32>
    %29 = arith.mulf %21, %28 : vector<8x2176xf32>
    %c0_5 = arith.constant 0 : index
    %c0_6 = arith.constant 0 : index
    %30 = vector.load %arg3[%c0_5, %c0_6] : memref<8x2176xf32, #tpu.memory_space<vmem>>, vector<8x2176xf32>
    tpu.vector_store %arg3[%c0_5, %c0_6], %29 {strides = array<i32>} : memref<8x2176xf32, #tpu.memory_space<vmem>>, vector<8x2176xf32>,
    return
  }
  func.func @transform_0(%arg0: i32) -> (i32, i32) {
    %c0_i32 = arith.constant 0 : i32
    %c0_i32_0 = arith.constant 0 : i32
    %c0_i32_1 = arith.constant 0 : i32
    return %c0_i32, %c0_i32_0 : i32, i32
  }
  func.func @transform_1(%arg0: i32) -> (i32, i32) {
    %c0_i32 = arith.constant 0 : i32
    %c0_i32_0 = arith.constant 0 : i32
    return %c0_i32, %arg0 : i32, i32
  }
  func.func @transform_2(%arg0: i32) -> (i32, i32) {
    %c0_i32 = arith.constant 0 : i32
    %c0_i32_0 = arith.constant 0 : i32
    return %c0_i32, %arg0 : i32, i32
  }
}

</mosaic_0001>

<llo_original>
// kernel: tpu_custom_call.1
$region0: #{tpu_custom_call.1}
  #allocation0 [shape = 'u32[]', space=smem, size = 0x4, offset = 0x4, fixed_abs, tag = 'smem constant byte address 0x4 - core index']
  #allocation1 [shape = 'u32[144,128]{1,0:T(1,128)}', space=vmem, size = 0x12000, scoped, tag = 'internal scratch']
  %s0 = inlined_call_operand.vmem [shape: f32[8,4], index: 0, kind: input, shape index: {}]
  %s1 = inlined_call_operand.hbm [shape: f32[3,4133], index: 1, kind: input, shape index: {}]
  %s2 = inlined_call_operand.hbm [shape: f32[8,4133], index: 2, kind: output, shape index: {}]
  %s3 = sld [smem:[#allocation0]]
  $region45: #{tpu_custom_call.1} parent=0
    _
  %s5 = ssub.s32 1, %s3
  %s6 = scalar_select 0, %s5, %s3
  $region1: #{tpu_custom_call.1} parent=0
    #allocation2 [shape = 'u8[69632]{0}', space=vmem, size = 0x11000, scoped, tag = 'input window, operand 1']
    #allocation3 [shape = 's32[2]{0}', space=sflag, size = 0x8, scoped, tag = 'scoped memory for tpu_custom_call.1']
    #allocation4 [shape = 's32[2]{0}', space=sflag, size = 0x8, scoped, tag = 'scoped memory for tpu_custom_call.1']
    #allocation5 [shape = 'u8[139264]{0}', space=vmem, size = 0x22000, scoped, tag = 'output window, operand 0']
    %7 = vsyncpa [#allocation3], 0
    %s8 = scalar_lea.sflag [#allocation3], 1
    %9 = vsyncpa %s8, 0
    %10 = vsyncpa [#allocation4], 0
    %s11 = scalar_lea.sflag [#allocation4], 1
    %12 = vsyncpa %s11, 0
    loop: start=0, step=1, limit=4
    $region2: #{tpu_custom_call.1} parent=1 // loop_pre_header
      _
    $region3: #{tpu_custom_call.1} parent=1 // loop_header
      %s14 = sphi 0, %s18
      %p15 = scmp.ge.s32.totalorder %s14, 4
      %s22 = sphi 0, %s22
      %s24 = sphi 0, %s22
      %s25 = sphi 0, %s24
      %s39 = sphi 0, %s25
      %s45 = sphi 0, %s47
      %s48 = sphi 0, %s45
      %s49 = sphi 0, %s48
      %s65 = sphi 0, %s49
      %s71 = sphi 0, %s73
      %s74 = sphi 0, %s71
      %s75 = sphi 0, %s74
      %s91 = sphi 0, %s75
    $region4: #{tpu_custom_call.1} parent=1 // loop_header_branch
      %17 = sbr.rel (%p15) target = $region8
    $region5: #{tpu_custom_call.1} parent=1 // loop_body
      %s19 = ssub.s32 %s14, 1
      %s20 = ssub.s32 %s14, 2
      %s21 = sadd.s32 %s14, 1
      %s23 = sadd.s32 %s22, 1
      %p26 = scmp.eq.s32.totalorder %s14, 1
      %p27 = scmp.ne.s32.totalorder %s22, %s24
      %p28 = scmp.eq.s32.totalorder %s14, 0
      %p29 = por %p27, %p28
      %p30 = scmp.ne.s32.totalorder %s22, %s24
      %p31 = scmp.eq.s32.totalorder %s19, 1
      %p32 = por %p30, %p31
      %p33 = scmp.ne.s32.totalorder %s24, %s25
      %p34 = scmp.eq.s32.totalorder %s19, 0
      %p35 = por %p33, %p34
      %p36 = scmp.ne.s32.totalorder %s24, %s25
      %p37 = scmp.eq.s32.totalorder %s20, 1
      %p38 = por %p36, %p37
      %p40 = scmp.ne.s32.totalorder %s25, %s39
      %p41 = scmp.eq.s32.totalorder %s20, 0
      %p42 = por %p40, %p41
      %s43 = ssub.s32 %s14, %s21
      %p44 = scmp.eq.s32.totalorder %s43, 0
      %s46 = sadd.s32 %s45, 1
      %s47 = scalar_select %p44, %s45, %s46
      %p50 = pneg %p44
      %p51 = scmp.eq.s32.totalorder %s14, 1
      %p52 = por %p50, %p51
      %p53 = scmp.ne.s32.totalorder %s45, %s48
      %p54 = scmp.eq.s32.totalorder %s14, 0
      %p55 = por %p53, %p54
      %p56 = scmp.ne.s32.totalorder %s45, %s48
      %p57 = scmp.eq.s32.totalorder %s19, 1
      %p58 = por %p56, %p57
      %p59 = scmp.ne.s32.totalorder %s48, %s49
      %p60 = scmp.eq.s32.totalorder %s19, 0
      %p61 = por %p59, %p60
      %p62 = scmp.ne.s32.totalorder %s48, %s49
      %p63 = scmp.eq.s32.totalorder %s20, 1
      %p64 = por %p62, %p63
      %p66 = scmp.ne.s32.totalorder %s49, %s65
      %p67 = scmp.eq.s32.totalorder %s20, 0
      %p68 = por %p66, %p67
      %s69 = ssub.s32 %s14, %s21
      %p70 = scmp.eq.s32.totalorder %s69, 0
      %s72 = sadd.s32 %s71, 1
      %s73 = scalar_select %p70, %s71, %s72
      %p76 = pneg %p70
      %p77 = scmp.eq.s32.totalorder %s14, 1
      %p78 = por %p76, %p77
      %p79 = scmp.ne.s32.totalorder %s71, %s74
      %p80 = scmp.eq.s32.totalorder %s14, 0
      %p81 = por %p79, %p80
      %p82 = scmp.ne.s32.totalorder %s71, %s74
      %p83 = scmp.eq.s32.totalorder %s19, 1
      %p84 = por %p82, %p83
      %p85 = scmp.ne.s32.totalorder %s74, %s75
      %p86 = scmp.eq.s32.totalorder %s19, 0
      %p87 = por %p85, %p86
      %p88 = scmp.ne.s32.totalorder %s74, %s75
      %p89 = scmp.eq.s32.totalorder %s20, 1
      %p90 = por %p88, %p89
      %p92 = scmp.ne.s32.totalorder %s75, %s91
      %p93 = scmp.eq.s32.totalorder %s20, 0
      %p94 = por %p92, %p93
      %p95 = scmp.le.s32.totalorder 1, %s14
      %p96 = scmp.lt.s32.totalorder %s14, 3
      %p97 = pnand %p95, %p96
      %p98 = pneg %p97
      // Predicated region
      $region9: #{tpu_custom_call.1} parent=5 // pred_check
        _
      $region10: #{tpu_custom_call.1} parent=5 // pred_check_branch
        %100 = sbr.rel (%p97) target = $region12
      $region11: #{tpu_custom_call.1} parent=5 // pred_region
        %s101 = ssub.s32 %s14, 1
        // Predicated region
        $region13: #{tpu_custom_call.1} parent=11 // pred_check
          %p102 = pneg %p35
        $region14: #{tpu_custom_call.1} parent=11 // pred_check_branch
          %104 = sbr.rel (%p102) target = $region16
        $region15: #{tpu_custom_call.1} parent=11 // pred_region
          _
        $region16: #{tpu_custom_call.1} parent=11 // pred_fallthru
          _
      $region12: #{tpu_custom_call.1} parent=5 // pred_fallthru
        _
      %p105 = scmp.lt.s32.totalorder %s14, 2
      // Predicated region
      $region17: #{tpu_custom_call.1} parent=5 // pred_check
        %p106 = pneg %p105
      $region18: #{tpu_custom_call.1} parent=5 // pred_check_branch
        %108 = sbr.rel (%p106) target = $region20
      $region19: #{tpu_custom_call.1} parent=5 // pred_region
        // Predicated region
        $region21: #{tpu_custom_call.1} parent=19 // pred_check
          %p109 = pneg %p55
        $region22: #{tpu_custom_call.1} parent=19 // pred_check_branch
          %111 = sbr.rel (%p109) target = $region24
        $region23: #{tpu_custom_call.1} parent=19 // pred_region
          %s112 = sand.u32 %s45, 1
          %s113 = scalar_lea.sflag [#allocation3], %s112
          %s114 = sand.u32 %s45, 1
          %s115 = smul.addr %s114, 68
          %s116 = scalar_lea.vmem [#allocation2], %s115
          %s117 = smul.u32 17, %s14
          %s118 = ssub.s32 33, %s117
          %p119 = scmp.lt.s32.totalorder %s118, 17
          %s120 = scalar_select %p119, %s118, 17
          %s121 = smul.u32 64, %s120
          %s123 = ssub.s32 1088, %s121
          %124 = vsyncadd %s113, %s123
          %p125 = scmp.ne.s32.totalorder 0, %s121
          %s126 = smul.addr %s117, 64
          %s127 = scalar_lea.hbm %s1, %s126
          %s128 = smul.u32 %s120, 4
          %s129 = sshll.u32 %s128, 4
          %s130 = sshll.u32 %s116, 4
          %s131 = int_to_ptr.vmem [resolvable:$true] %s130
          %133 = dma.hbm_to_vmem [thread:$0]  (%p125), %s127, %s129, %s131, %s113
        $region24: #{tpu_custom_call.1} parent=19 // pred_fallthru
          _
      $region20: #{tpu_custom_call.1} parent=5 // pred_fallthru
        _
      %p134 = scmp.le.s32.totalorder 1, %s14
      %p135 = scmp.lt.s32.totalorder %s14, 3
      %p136 = pnand %p134, %p135
      %p137 = pneg %p136
      // Predicated region
      $region25: #{tpu_custom_call.1} parent=5 // pred_check
        _
      $region26: #{tpu_custom_call.1} parent=5 // pred_check_branch
        %139 = sbr.rel (%p136) target = $region28
      $region27: #{tpu_custom_call.1} parent=5 // pred_region
        %s140 = ssub.s32 %s14, 1
        %s141 = sand.u32 %s48, 1
        %s142 = scalar_lea.sflag [#allocation3], %s141
        %s143 = sand.u32 %s48, 1
        %s144 = smul.addr %s143, 68
        %s145 = scalar_lea.vmem [#allocation2], %s144
        // Predicated region
        $region29: #{tpu_custom_call.1} parent=27 // pred_check
          %p146 = pneg %p61
        $region30: #{tpu_custom_call.1} parent=27 // pred_check_branch
          %148 = sbr.rel (%p146) target = $region32
        $region31: #{tpu_custom_call.1} parent=27 // pred_region
          %149 = dma.done %s142, 1088
        $region32: #{tpu_custom_call.1} parent=27 // pred_fallthru
          _
        %p150 = pneg %p35
        %p151 = pneg %p32
        %s152 = sand.u32 %s48, 1
        %s153 = scalar_lea.sflag [#allocation3], %s152
        %s154 = sand.u32 %s48, 1
        %s155 = smul.addr %s154, 68
        %s156 = scalar_lea.vmem [#allocation2], %s155
        %p157 = pneg %p61
        %p158 = pneg %p58
        %p159 = pneg %p87
        %p160 = pneg %p84
        %s161 = sand.u32 %s74, 1
        %s162 = scalar_lea.sflag [#allocation4], %s161
        %s163 = sand.u32 %s74, 1
        %s164 = smul.addr %s163, 136
        %s165 = scalar_lea.vmem [#allocation5], %s164
        %s166 = smul.u32 17, %s19
        %s167 = ssub.s32 33, %s166
        %p168 = scmp.lt.s32.totalorder %s167, 17
        %s169 = scalar_select %p168, %s167, 17
        %s170 = smul.u32 64, %s169
        %s171 = smul.u32 17, %s19
        %s172 = ssub.s32 33, %s171
        %p173 = scmp.lt.s32.totalorder %s172, 17
        %s174 = scalar_select %p173, %s172, 17
        %s175 = smul.u32 128, %s174
        %v176 = vld [vmem:[%s0] sm:$0xff]
        %v177 = vld [vmem:[%s145] sm:$0x77]
        %v178 = vld [vmem:[%s145 + $0x8] sm:$0x77]
        %v179 = vld [vmem:[%s145 + $0x10] sm:$0x77]
        %v180 = vld [vmem:[%s145 + $0x18] sm:$0x77]
        %v181 = vld [vmem:[%s145 + $0x20] sm:$0x77]
        %v182 = vld [vmem:[%s145 + $0x28] sm:$0x77]
        %v183 = vld [vmem:[%s145 + $0x30] sm:$0x77]
        %v184 = vld [vmem:[%s145 + $0x38] sm:$0x77]
        %v185 = vld [vmem:[%s145 + $0x40] sm:$0x7]
        %187 = vset.pattern.permute.xlu0 0
        %188 = vperm.xlu0 %187, %v176
        %v189 = vpop.permute.xlu0 %188
        %v200 = vlaneseq
        %v201 = vshrl.u32 %v200, 7
        %v202 = vsub.s32 0, %v201
        %v203 = vrot.slane %v177, %v202
        %v204 = vlaneseq
        %v205 = vshrl.u32 %v204, 7
        %v206 = vsub.s32 4, %v205
        %v207 = vrot.slane %v177, %v206
        %v208 = vlaneseq
        %v209 = vshrl.u32 %v208, 7
        %v210 = vsub.s32 0, %v209
        %v211 = vrot.slane %v178, %v210
        %v212 = vlaneseq
        %v213 = vshrl.u32 %v212, 7
        %v214 = vsub.s32 4, %v213
        %v215 = vrot.slane %v178, %v214
        %v216 = vlaneseq
        %v217 = vshrl.u32 %v216, 7
        %v218 = vsub.s32 0, %v217
        %v219 = vrot.slane %v179, %v218
        %v220 = vlaneseq
        %v221 = vshrl.u32 %v220, 7
        %v222 = vsub.s32 4, %v221
        %v223 = vrot.slane %v179, %v222
        %v224 = vlaneseq
        %v225 = vshrl.u32 %v224, 7
        %v226 = vsub.s32 0, %v225
        %v227 = vrot.slane %v180, %v226
        %v228 = vlaneseq
        %v229 = vshrl.u32 %v228, 7
        %v230 = vsub.s32 4, %v229
        %v231 = vrot.slane %v180, %v230
        %v232 = vlaneseq
        %v233 = vshrl.u32 %v232, 7
        %v234 = vsub.s32 0, %v233
        %v235 = vrot.slane %v181, %v234
        %v236 = vlaneseq
        %v237 = vshrl.u32 %v236, 7
        %v238 = vsub.s32 4, %v237
        %v239 = vrot.slane %v181, %v238
        %v240 = vlaneseq
        %v241 = vshrl.u32 %v240, 7
        %v242 = vsub.s32 0, %v241
        %v243 = vrot.slane %v182, %v242
        %v244 = vlaneseq
        %v245 = vshrl.u32 %v244, 7
        %v246 = vsub.s32 4, %v245
        %v247 = vrot.slane %v182, %v246
        %v248 = vlaneseq
        %v249 = vshrl.u32 %v248, 7
        %v250 = vsub.s32 0, %v249
        %v251 = vrot.slane %v183, %v250
        %v252 = vlaneseq
        %v253 = vshrl.u32 %v252, 7
        %v254 = vsub.s32 4, %v253
        %v255 = vrot.slane %v183, %v254
        %v256 = vlaneseq
        %v257 = vshrl.u32 %v256, 7
        %v258 = vsub.s32 0, %v257
        %v259 = vrot.slane %v184, %v258
        %v260 = vlaneseq
        %v261 = vshrl.u32 %v260, 7
        %v262 = vsub.s32 4, %v261
        %v263 = vrot.slane %v184, %v262
        %v264 = vlaneseq
        %v265 = vshrl.u32 %v264, 7
        %v266 = vsub.s32 0, %v265
        %v267 = vrot.slane %v185, %v266
        %v285 = vlaneseq
        %v286 = vshrl.u32 %v285, 7
        %v287 = vsub.s32 0, %v286
        %v288 = vrot.slane %v203, %v287
        %v289 = vlaneseq
        %v290 = vshrl.u32 %v289, 7
        %v291 = vsub.s32 0, %v290
        %v292 = vrot.slane %v207, %v291
        %v293 = vlaneseq
        %v294 = vshrl.u32 %v293, 7
        %v295 = vsub.s32 0, %v294
        %v296 = vrot.slane %v211, %v295
        %v297 = vlaneseq
        %v298 = vshrl.u32 %v297, 7
        %v299 = vsub.s32 0, %v298
        %v300 = vrot.slane %v215, %v299
        %v301 = vlaneseq
        %v302 = vshrl.u32 %v301, 7
        %v303 = vsub.s32 0, %v302
        %v304 = vrot.slane %v219, %v303
        %v305 = vlaneseq
        %v306 = vshrl.u32 %v305, 7
        %v307 = vsub.s32 0, %v306
        %v308 = vrot.slane %v223, %v307
        %v309 = vlaneseq
        %v310 = vshrl.u32 %v309, 7
        %v311 = vsub.s32 0, %v310
        %v312 = vrot.slane %v227, %v311
        %v313 = vlaneseq
        %v314 = vshrl.u32 %v313, 7
        %v315 = vsub.s32 0, %v314
        %v316 = vrot.slane %v231, %v315
        %v317 = vlaneseq
        %v318 = vshrl.u32 %v317, 7
        %v319 = vsub.s32 0, %v318
        %v320 = vrot.slane %v235, %v319
        %v321 = vlaneseq
        %v322 = vshrl.u32 %v321, 7
        %v323 = vsub.s32 0, %v322
        %v324 = vrot.slane %v239, %v323
        %v325 = vlaneseq
        %v326 = vshrl.u32 %v325, 7
        %v327 = vsub.s32 0, %v326
        %v328 = vrot.slane %v243, %v327
        %v329 = vlaneseq
        %v330 = vshrl.u32 %v329, 7
        %v331 = vsub.s32 0, %v330
        %v332 = vrot.slane %v247, %v331
        %v333 = vlaneseq
        %v334 = vshrl.u32 %v333, 7
        %v335 = vsub.s32 0, %v334
        %v336 = vrot.slane %v251, %v335
        %v337 = vlaneseq
        %v338 = vshrl.u32 %v337, 7
        %v339 = vsub.s32 0, %v338
        %v340 = vrot.slane %v255, %v339
        %v341 = vlaneseq
        %v342 = vshrl.u32 %v341, 7
        %v343 = vsub.s32 0, %v342
        %v344 = vrot.slane %v259, %v343
        %v345 = vlaneseq
        %v346 = vshrl.u32 %v345, 7
        %v347 = vsub.s32 0, %v346
        %v348 = vrot.slane %v263, %v347
        %v349 = vlaneseq
        %v350 = vshrl.u32 %v349, 7
        %v351 = vsub.s32 0, %v350
        %v352 = vrot.slane %v267, %v351
        %v353 = vmul.f32 %v189, %v288
        %v354 = vmul.f32 %v189, %v292
        %v355 = vmul.f32 %v189, %v296
        %v356 = vmul.f32 %v189, %v300
        %v357 = vmul.f32 %v189, %v304
        %v358 = vmul.f32 %v189, %v308
        %v359 = vmul.f32 %v189, %v312
        %v360 = vmul.f32 %v189, %v316
        %v361 = vmul.f32 %v189, %v320
        %v362 = vmul.f32 %v189, %v324
        %v363 = vmul.f32 %v189, %v328
        %v364 = vmul.f32 %v189, %v332
        %v365 = vmul.f32 %v189, %v336
        %v366 = vmul.f32 %v189, %v340
        %v367 = vmul.f32 %v189, %v344
        %v368 = vmul.f32 %v189, %v348
        %v369 = vmul.f32 %v189, %v352
        %370 = vset.pattern.permute.xlu0 1
        %371 = vperm.xlu0 %370, %v176
        %v372 = vpop.permute.xlu0 %371
        %v374 = vlaneseq
        %v375 = vshrl.u32 %v374, 7
        %v376 = vsub.s32 1, %v375
        %v377 = vrot.slane %v177, %v376
        %v378 = vlaneseq
        %v379 = vshrl.u32 %v378, 7
        %v380 = vsub.s32 5, %v379
        %v381 = vrot.slane %v177, %v380
        %v382 = vlaneseq
        %v383 = vshrl.u32 %v382, 7
        %v384 = vsub.s32 1, %v383
        %v385 = vrot.slane %v178, %v384
        %v386 = vlaneseq
        %v387 = vshrl.u32 %v386, 7
        %v388 = vsub.s32 5, %v387
        %v389 = vrot.slane %v178, %v388
        %v390 = vlaneseq
        %v391 = vshrl.u32 %v390, 7
        %v392 = vsub.s32 1, %v391
        %v393 = vrot.slane %v179, %v392
        %v394 = vlaneseq
        %v395 = vshrl.u32 %v394, 7
        %v396 = vsub.s32 5, %v395
        %v397 = vrot.slane %v179, %v396
        %v398 = vlaneseq
        %v399 = vshrl.u32 %v398, 7
        %v400 = vsub.s32 1, %v399
        %v401 = vrot.slane %v180, %v400
        %v402 = vlaneseq
        %v403 = vshrl.u32 %v402, 7
        %v404 = vsub.s32 5, %v403
        %v405 = vrot.slane %v180, %v404
        %v406 = vlaneseq
        %v407 = vshrl.u32 %v406, 7
        %v408 = vsub.s32 1, %v407
        %v409 = vrot.slane %v181, %v408
        %v410 = vlaneseq
        %v411 = vshrl.u32 %v410, 7
        %v412 = vsub.s32 5, %v411
        %v413 = vrot.slane %v181, %v412
        %v414 = vlaneseq
        %v415 = vshrl.u32 %v414, 7
        %v416 = vsub.s32 1, %v415
        %v417 = vrot.slane %v182, %v416
        %v418 = vlaneseq
        %v419 = vshrl.u32 %v418, 7
        %v420 = vsub.s32 5, %v419
        %v421 = vrot.slane %v182, %v420
        %v422 = vlaneseq
        %v423 = vshrl.u32 %v422, 7
        %v424 = vsub.s32 1, %v423
        %v425 = vrot.slane %v183, %v424
        %v426 = vlaneseq
        %v427 = vshrl.u32 %v426, 7
        %v428 = vsub.s32 5, %v427
        %v429 = vrot.slane %v183, %v428
        %v430 = vlaneseq
        %v431 = vshrl.u32 %v430, 7
        %v432 = vsub.s32 1, %v431
        %v433 = vrot.slane %v184, %v432
        %v434 = vlaneseq
        %v435 = vshrl.u32 %v434, 7
        %v436 = vsub.s32 5, %v435
        %v437 = vrot.slane %v184, %v436
        %v438 = vlaneseq
        %v439 = vshrl.u32 %v438, 7
        %v440 = vsub.s32 1, %v439
        %v441 = vrot.slane %v185, %v440
        %v459 = vlaneseq
        %v460 = vshrl.u32 %v459, 7
        %v461 = vsub.s32 1, %v460
        %v462 = vrot.slane %v377, %v461
        %v463 = vlaneseq
        %v464 = vshrl.u32 %v463, 7
        %v465 = vsub.s32 1, %v464
        %v466 = vrot.slane %v381, %v465
        %v467 = vlaneseq
        %v468 = vshrl.u32 %v467, 7
        %v469 = vsub.s32 1, %v468
        %v470 = vrot.slane %v385, %v469
        %v471 = vlaneseq
        %v472 = vshrl.u32 %v471, 7
        %v473 = vsub.s32 1, %v472
        %v474 = vrot.slane %v389, %v473
        %v475 = vlaneseq
        %v476 = vshrl.u32 %v475, 7
        %v477 = vsub.s32 1, %v476
        %v478 = vrot.slane %v393, %v477
        %v479 = vlaneseq
        %v480 = vshrl.u32 %v479, 7
        %v481 = vsub.s32 1, %v480
        %v482 = vrot.slane %v397, %v481
        %v483 = vlaneseq
        %v484 = vshrl.u32 %v483, 7
        %v485 = vsub.s32 1, %v484
        %v486 = vrot.slane %v401, %v485
        %v487 = vlaneseq
        %v488 = vshrl.u32 %v487, 7
        %v489 = vsub.s32 1, %v488
        %v490 = vrot.slane %v405, %v489
        %v491 = vlaneseq
        %v492 = vshrl.u32 %v491, 7
        %v493 = vsub.s32 1, %v492
        %v494 = vrot.slane %v409, %v493
        %v495 = vlaneseq
        %v496 = vshrl.u32 %v495, 7
        %v497 = vsub.s32 1, %v496
        %v498 = vrot.slane %v413, %v497
        %v499 = vlaneseq
        %v500 = vshrl.u32 %v499, 7
        %v501 = vsub.s32 1, %v500
        %v502 = vrot.slane %v417, %v501
        %v503 = vlaneseq
        %v504 = vshrl.u32 %v503, 7
        %v505 = vsub.s32 1, %v504
        %v506 = vrot.slane %v421, %v505
        %v507 = vlaneseq
        %v508 = vshrl.u32 %v507, 7
        %v509 = vsub.s32 1, %v508
        %v510 = vrot.slane %v425, %v509
        %v511 = vlaneseq
        %v512 = vshrl.u32 %v511, 7
        %v513 = vsub.s32 1, %v512
        %v514 = vrot.slane %v429, %v513
        %v515 = vlaneseq
        %v516 = vshrl.u32 %v515, 7
        %v517 = vsub.s32 1, %v516
        %v518 = vrot.slane %v433, %v517
        %v519 = vlaneseq
        %v520 = vshrl.u32 %v519, 7
        %v521 = vsub.s32 1, %v520
        %v522 = vrot.slane %v437, %v521
        %v523 = vlaneseq
        %v524 = vshrl.u32 %v523, 7
        %v525 = vsub.s32 1, %v524
        %v526 = vrot.slane %v441, %v525
        %v527 = vmul.f32 %v372, %v462
        %v528 = vmul.f32 %v372, %v466
        %v529 = vmul.f32 %v372, %v470
        %v530 = vmul.f32 %v372, %v474
        %v531 = vmul.f32 %v372, %v478
        %v532 = vmul.f32 %v372, %v482
        %v533 = vmul.f32 %v372, %v486
        %v534 = vmul.f32 %v372, %v490
        %v535 = vmul.f32 %v372, %v494
        %v536 = vmul.f32 %v372, %v498
        %v537 = vmul.f32 %v372, %v502
        %v538 = vmul.f32 %v372, %v506
        %v539 = vmul.f32 %v372, %v510
        %v540 = vmul.f32 %v372, %v514
        %v541 = vmul.f32 %v372, %v518
        %v542 = vmul.f32 %v372, %v522
        %v543 = vmul.f32 %v372, %v526
        %v544 = vadd.f32 %v353, %v527
        %v545 = vadd.f32 %v354, %v528
        %v546 = vadd.f32 %v355, %v529
        %v547 = vadd.f32 %v356, %v530
        %v548 = vadd.f32 %v357, %v531
        %v549 = vadd.f32 %v358, %v532
        %v550 = vadd.f32 %v359, %v533
        %v551 = vadd.f32 %v360, %v534
        %v552 = vadd.f32 %v361, %v535
        %v553 = vadd.f32 %v362, %v536
        %v554 = vadd.f32 %v363, %v537
        %v555 = vadd.f32 %v364, %v538
        %v556 = vadd.f32 %v365, %v539
        %v557 = vadd.f32 %v366, %v540
        %v558 = vadd.f32 %v367, %v541
        %v559 = vadd.f32 %v368, %v542
        %v560 = vadd.f32 %v369, %v543
        %561 = vset.pattern.permute.xlu0 2
        %562 = vperm.xlu0 %561, %v176
        %v563 = vpop.permute.xlu0 %562
        %v565 = vlaneseq
        %v566 = vshrl.u32 %v565, 7
        %v567 = vsub.s32 2, %v566
        %v568 = vrot.slane %v177, %v567
        %v569 = vlaneseq
        %v570 = vshrl.u32 %v569, 7
        %v571 = vsub.s32 6, %v570
        %v572 = vrot.slane %v177, %v571
        %v573 = vlaneseq
        %v574 = vshrl.u32 %v573, 7
        %v575 = vsub.s32 2, %v574
        %v576 = vrot.slane %v178, %v575
        %v577 = vlaneseq
        %v578 = vshrl.u32 %v577, 7
        %v579 = vsub.s32 6, %v578
        %v580 = vrot.slane %v178, %v579
        %v581 = vlaneseq
        %v582 = vshrl.u32 %v581, 7
        %v583 = vsub.s32 2, %v582
        %v584 = vrot.slane %v179, %v583
        %v585 = vlaneseq
        %v586 = vshrl.u32 %v585, 7
        %v587 = vsub.s32 6, %v586
        %v588 = vrot.slane %v179, %v587
        %v589 = vlaneseq
        %v590 = vshrl.u32 %v589, 7
        %v591 = vsub.s32 2, %v590
        %v592 = vrot.slane %v180, %v591
        %v593 = vlaneseq
        %v594 = vshrl.u32 %v593, 7
        %v595 = vsub.s32 6, %v594
        %v596 = vrot.slane %v180, %v595
        %v597 = vlaneseq
        %v598 = vshrl.u32 %v597, 7
        %v599 = vsub.s32 2, %v598
        %v600 = vrot.slane %v181, %v599
        %v601 = vlaneseq
        %v602 = vshrl.u32 %v601, 7
        %v603 = vsub.s32 6, %v602
        %v604 = vrot.slane %v181, %v603
        %v605 = vlaneseq
        %v606 = vshrl.u32 %v605, 7
        %v607 = vsub.s32 2, %v606
        %v608 = vrot.slane %v182, %v607
        %v609 = vlaneseq
        %v610 = vshrl.u32 %v609, 7
        %v611 = vsub.s32 6, %v610
        %v612 = vrot.slane %v182, %v611
        %v613 = vlaneseq
        %v614 = vshrl.u32 %v613, 7
        %v615 = vsub.s32 2, %v614
        %v616 = vrot.slane %v183, %v615
        %v617 = vlaneseq
        %v618 = vshrl.u32 %v617, 7
        %v619 = vsub.s32 6, %v618
        %v620 = vrot.slane %v183, %v619
        %v621 = vlaneseq
        %v622 = vshrl.u32 %v621, 7
        %v623 = vsub.s32 2, %v622
        %v624 = vrot.slane %v184, %v623
        %v625 = vlaneseq
        %v626 = vshrl.u32 %v625, 7
        %v627 = vsub.s32 6, %v626
        %v628 = vrot.slane %v184, %v627
        %v629 = vlaneseq
        %v630 = vshrl.u32 %v629, 7
        %v631 = vsub.s32 2, %v630
        %v632 = vrot.slane %v185, %v631
        %v650 = vlaneseq
        %v651 = vshrl.u32 %v650, 7
        %v652 = vsub.s32 2, %v651
        %v653 = vrot.slane %v568, %v652
        %v654 = vlaneseq
        %v655 = vshrl.u32 %v654, 7
        %v656 = vsub.s32 2, %v655
        %v657 = vrot.slane %v572, %v656
        %v658 = vlaneseq
        %v659 = vshrl.u32 %v658, 7
        %v660 = vsub.s32 2, %v659
        %v661 = vrot.slane %v576, %v660
        %v662 = vlaneseq
        %v663 = vshrl.u32 %v662, 7
        %v664 = vsub.s32 2, %v663
        %v665 = vrot.slane %v580, %v664
        %v666 = vlaneseq
        %v667 = vshrl.u32 %v666, 7
        %v668 = vsub.s32 2, %v667
        %v669 = vrot.slane %v584, %v668
        %v670 = vlaneseq
        %v671 = vshrl.u32 %v670, 7
        %v672 = vsub.s32 2, %v671
        %v673 = vrot.slane %v588, %v672
        %v674 = vlaneseq
        %v675 = vshrl.u32 %v674, 7
        %v676 = vsub.s32 2, %v675
        %v677 = vrot.slane %v592, %v676
        %v678 = vlaneseq
        %v679 = vshrl.u32 %v678, 7
        %v680 = vsub.s32 2, %v679
        %v681 = vrot.slane %v596, %v680
        %v682 = vlaneseq
        %v683 = vshrl.u32 %v682, 7
        %v684 = vsub.s32 2, %v683
        %v685 = vrot.slane %v600, %v684
        %v686 = vlaneseq
        %v687 = vshrl.u32 %v686, 7
        %v688 = vsub.s32 2, %v687
        %v689 = vrot.slane %v604, %v688
        %v690 = vlaneseq
        %v691 = vshrl.u32 %v690, 7
        %v692 = vsub.s32 2, %v691
        %v693 = vrot.slane %v608, %v692
        %v694 = vlaneseq
        %v695 = vshrl.u32 %v694, 7
        %v696 = vsub.s32 2, %v695
        %v697 = vrot.slane %v612, %v696
        %v698 = vlaneseq
        %v699 = vshrl.u32 %v698, 7
        %v700 = vsub.s32 2, %v699
        %v701 = vrot.slane %v616, %v700
        %v702 = vlaneseq
        %v703 = vshrl.u32 %v702, 7
        %v704 = vsub.s32 2, %v703
        %v705 = vrot.slane %v620, %v704
        %v706 = vlaneseq
        %v707 = vshrl.u32 %v706, 7
        %v708 = vsub.s32 2, %v707
        %v709 = vrot.slane %v624, %v708
        %v710 = vlaneseq
        %v711 = vshrl.u32 %v710, 7
        %v712 = vsub.s32 2, %v711
        %v713 = vrot.slane %v628, %v712
        %v714 = vlaneseq
        %v715 = vshrl.u32 %v714, 7
        %v716 = vsub.s32 2, %v715
        %v717 = vrot.slane %v632, %v716
        %v718 = vmul.f32 %v563, %v653
        %v719 = vmul.f32 %v563, %v657
        %v720 = vmul.f32 %v563, %v661
        %v721 = vmul.f32 %v563, %v665
        %v722 = vmul.f32 %v563, %v669
        %v723 = vmul.f32 %v563, %v673
        %v724 = vmul.f32 %v563, %v677
        %v725 = vmul.f32 %v563, %v681
        %v726 = vmul.f32 %v563, %v685
        %v727 = vmul.f32 %v563, %v689
        %v728 = vmul.f32 %v563, %v693
        %v729 = vmul.f32 %v563, %v697
        %v730 = vmul.f32 %v563, %v701
        %v731 = vmul.f32 %v563, %v705
        %v732 = vmul.f32 %v563, %v709
        %v733 = vmul.f32 %v563, %v713
        %v734 = vmul.f32 %v563, %v717
        %v735 = vadd.f32 %v544, %v718
        %v736 = vadd.f32 %v545, %v719
        %v737 = vadd.f32 %v546, %v720
        %v738 = vadd.f32 %v547, %v721
        %v739 = vadd.f32 %v548, %v722
        %v740 = vadd.f32 %v549, %v723
        %v741 = vadd.f32 %v550, %v724
        %v742 = vadd.f32 %v551, %v725
        %v743 = vadd.f32 %v552, %v726
        %v744 = vadd.f32 %v553, %v727
        %v745 = vadd.f32 %v554, %v728
        %v746 = vadd.f32 %v555, %v729
        %v747 = vadd.f32 %v556, %v730
        %v748 = vadd.f32 %v557, %v731
        %v749 = vadd.f32 %v558, %v732
        %v750 = vadd.f32 %v559, %v733
        %v751 = vadd.f32 %v560, %v734
        %752 = vset.pattern.permute.xlu0 3
        %753 = vperm.xlu0 %752, %v176
        %v754 = vpop.permute.xlu0 %753
        %v756 = vadd.f32 %v735, %v754
        %v757 = vadd.f32 %v736, %v754
        %v758 = vadd.f32 %v737, %v754
        %v759 = vadd.f32 %v738, %v754
        %v760 = vadd.f32 %v739, %v754
        %v761 = vadd.f32 %v740, %v754
        %v762 = vadd.f32 %v741, %v754
        %v763 = vadd.f32 %v742, %v754
        %v764 = vadd.f32 %v743, %v754
        %v765 = vadd.f32 %v744, %v754
        %v766 = vadd.f32 %v745, %v754
        %v767 = vadd.f32 %v746, %v754
        %v768 = vadd.f32 %v747, %v754
        %v769 = vadd.f32 %v748, %v754
        %v770 = vadd.f32 %v749, %v754
        %v771 = vadd.f32 %v750, %v754
        %v772 = vadd.f32 %v751, %v754
        %v773 = vmul.f32 %v756, 0.035677407
        %v774 = vmul.f32 %v757, 0.035677407
        %v775 = vmul.f32 %v758, 0.035677407
        %v776 = vmul.f32 %v759, 0.035677407
        %v777 = vmul.f32 %v760, 0.035677407
        %v778 = vmul.f32 %v761, 0.035677407
        %v779 = vmul.f32 %v762, 0.035677407
        %v780 = vmul.f32 %v763, 0.035677407
        %v781 = vmul.f32 %v764, 0.035677407
        %v782 = vmul.f32 %v765, 0.035677407
        %v783 = vmul.f32 %v766, 0.035677407
        %v784 = vmul.f32 %v767, 0.035677407
        %v785 = vmul.f32 %v768, 0.035677407
        %v786 = vmul.f32 %v769, 0.035677407
        %v787 = vmul.f32 %v770, 0.035677407
        %v788 = vmul.f32 %v771, 0.035677407
        %v789 = vmul.f32 %v772, 0.035677407
        %v790 = vtanh.pop %v773
        %v791 = vtanh.pop %v774
        %v792 = vtanh.pop %v775
        %v793 = vtanh.pop %v776
        %v794 = vtanh.pop %v777
        %v795 = vtanh.pop %v778
        %v796 = vtanh.pop %v779
        %v797 = vtanh.pop %v780
        %v798 = vtanh.pop %v781
        %v799 = vtanh.pop %v782
        %v800 = vtanh.pop %v783
        %v801 = vtanh.pop %v784
        %v802 = vtanh.pop %v785
        %v803 = vtanh.pop %v786
        %v804 = vtanh.pop %v787
        %v805 = vtanh.pop %v788
        %v806 = vtanh.pop %v789
        %v807 = vmul.f32 %v790, 0.5
        %v808 = vmul.f32 %v791, 0.5
        %v809 = vmul.f32 %v792, 0.5
        %v810 = vmul.f32 %v793, 0.5
        %v811 = vmul.f32 %v794, 0.5
        %v812 = vmul.f32 %v795, 0.5
        %v813 = vmul.f32 %v796, 0.5
        %v814 = vmul.f32 %v797, 0.5
        %v815 = vmul.f32 %v798, 0.5
        %v816 = vmul.f32 %v799, 0.5
        %v817 = vmul.f32 %v800, 0.5
        %v818 = vmul.f32 %v801, 0.5
        %v819 = vmul.f32 %v802, 0.5
        %v820 = vmul.f32 %v803, 0.5
        %v821 = vmul.f32 %v804, 0.5
        %v822 = vmul.f32 %v805, 0.5
        %v823 = vmul.f32 %v806, 0.5
        %v824 = vadd.f32 %v807, 0.5
        %v825 = vadd.f32 %v808, 0.5
        %v826 = vadd.f32 %v809, 0.5
        %v827 = vadd.f32 %v810, 0.5
        %v828 = vadd.f32 %v811, 0.5
        %v829 = vadd.f32 %v812, 0.5
        %v830 = vadd.f32 %v813, 0.5
        %v831 = vadd.f32 %v814, 0.5
        %v832 = vadd.f32 %v815, 0.5
        %v833 = vadd.f32 %v816, 0.5
        %v834 = vadd.f32 %v817, 0.5
        %v835 = vadd.f32 %v818, 0.5
        %v836 = vadd.f32 %v819, 0.5
        %v837 = vadd.f32 %v820, 0.5
        %v838 = vadd.f32 %v821, 0.5
        %v839 = vadd.f32 %v822, 0.5
        %v840 = vadd.f32 %v823, 0.5
        %v841 = vmul.f32 %v756, %v824
        %v842 = vmul.f32 %v757, %v825
        %v843 = vmul.f32 %v758, %v826
        %v844 = vmul.f32 %v759, %v827
        %v845 = vmul.f32 %v760, %v828
        %v846 = vmul.f32 %v761, %v829
        %v847 = vmul.f32 %v762, %v830
        %v848 = vmul.f32 %v763, %v831
        %v849 = vmul.f32 %v764, %v832
        %v850 = vmul.f32 %v765, %v833
        %v851 = vmul.f32 %v766, %v834
        %v852 = vmul.f32 %v767, %v835
        %v853 = vmul.f32 %v768, %v836
        %v854 = vmul.f32 %v769, %v837
        %v855 = vmul.f32 %v770, %v838
        %v856 = vmul.f32 %v771, %v839
        %v857 = vmul.f32 %v772, %v840
        %858 = vst [vmem:[%s165] sm:$0xff] %v841
        %859 = vst [vmem:[%s165 + $0x8] sm:$0xff] %v842
        %860 = vst [vmem:[%s165 + $0x10] sm:$0xff] %v843
        %861 = vst [vmem:[%s165 + $0x18] sm:$0xff] %v844
        %862 = vst [vmem:[%s165 + $0x20] sm:$0xff] %v845
        %863 = vst [vmem:[%s165 + $0x28] sm:$0xff] %v846
        %864 = vst [vmem:[%s165 + $0x30] sm:$0xff] %v847
        %865 = vst [vmem:[%s165 + $0x38] sm:$0xff] %v848
        %866 = vst [vmem:[%s165 + $0x40] sm:$0xff] %v849
        %867 = vst [vmem:[%s165 + $0x48] sm:$0xff] %v850
        %868 = vst [vmem:[%s165 + $0x50] sm:$0xff] %v851
        %869 = vst [vmem:[%s165 + $0x58] sm:$0xff] %v852
        %870 = vst [vmem:[%s165 + $0x60] sm:$0xff] %v853
        %871 = vst [vmem:[%s165 + $0x68] sm:$0xff] %v854
        %872 = vst [vmem:[%s165 + $0x70] sm:$0xff] %v855
        %873 = vst [vmem:[%s165 + $0x78] sm:$0xff] %v856
        %874 = vst [vmem:[%s165 + $0x80] sm:$0xff] %v857
        %s875 = sand.u32 %s74, 1
        %s876 = scalar_lea.sflag [#allocation4], %s875
        %s877 = sand.u32 %s74, 1
        %s878 = smul.addr %s877, 136
        %s879 = scalar_lea.vmem [#allocation5], %s878
        // Predicated region
        $region33: #{tpu_custom_call.1} parent=27 // pred_check
          %p880 = pneg %p84
        $region34: #{tpu_custom_call.1} parent=27 // pred_check_branch
          %882 = sbr.rel (%p880) target = $region36
        $region35: #{tpu_custom_call.1} parent=27 // pred_region
          %s883 = smul.u32 17, %s19
          %s884 = ssub.s32 33, %s883
          %p885 = scmp.lt.s32.totalorder %s884, 17
          %s886 = scalar_select %p885, %s884, 17
          %s887 = smul.u32 128, %s886
          %s889 = ssub.s32 2176, %s887
          %890 = vsyncadd %s876, %s889
          %p891 = scmp.ne.s32.totalorder 0, %s887
          %s892 = smul.addr %s883, 128
          %s893 = scalar_lea.hbm %s2, %s892
          %s894 = smul.u32 %s886, 8
          %s895 = sshll.u32 %s894, 4
          %s896 = sshll.u32 %s879, 4
          %s897 = int_to_ptr.vmem [resolvable:$true] %s896
          %899 = dma.vmem_to_hbm [thread:$0]  (%p891), %s897, %s895, %s893, %s876
        $region36: #{tpu_custom_call.1} parent=27 // pred_fallthru
          _
      $region28: #{tpu_custom_call.1} parent=5 // pred_fallthru
        _
      %p900 = scmp.le.s32.totalorder 2, %s14
      // Predicated region
      $region37: #{tpu_custom_call.1} parent=5 // pred_check
        %p901 = pneg %p900
      $region38: #{tpu_custom_call.1} parent=5 // pred_check_branch
        %903 = sbr.rel (%p901) target = $region40
      $region39: #{tpu_custom_call.1} parent=5 // pred_region
        %s904 = ssub.s32 %s14, 2
        // Predicated region
        $region41: #{tpu_custom_call.1} parent=39 // pred_check
          %p905 = pneg %p90
        $region42: #{tpu_custom_call.1} parent=39 // pred_check_branch
          %907 = sbr.rel (%p905) target = $region44
        $region43: #{tpu_custom_call.1} parent=39 // pred_region
          %s908 = sand.u32 %s75, 1
          %s909 = scalar_lea.sflag [#allocation4], %s908
          %s910 = sand.u32 %s75, 1
          %s911 = smul.addr %s910, 136
          %s912 = scalar_lea.vmem [#allocation5], %s911
          %913 = dma.done %s909, 2176
        $region44: #{tpu_custom_call.1} parent=39 // pred_fallthru
          _
      $region40: #{tpu_custom_call.1} parent=5 // pred_fallthru
        _
    $region6: #{tpu_custom_call.1} parent=1 // loop_footer
      %s18 = sadd.s32 1, %s14
    $region7: #{tpu_custom_call.1} parent=1 // loop_footer_branch
      %13 = sbr.rel target = $region3
    $region8: #{tpu_custom_call.1} parent=1 // loop_exit
      _
    %914 = vsyncpa [#allocation3], 1
    %s915 = scalar_lea.sflag [#allocation3], 1
    %916 = vsyncpa %s915, 1
    %917 = vsyncpa [#allocation4], 1
    %s918 = scalar_lea.sflag [#allocation4], 1
    %919 = vsyncpa %s918, 1

</llo_original>
